<compile_context>
chip_gen: v6e
topology: v6e:2x2x1
jax: 0.10.0
libtpu: 0.0.40
codegen_flags: <defaults>
</compile_context>

<pallas_src>
import jax
import jax.numpy as jnp
from jax.experimental import pallas as pl
from jax.experimental.pallas import tpu as pltpu

EPS = 1e-5
LANE = 128


def _round_up(n, m):
    return ((n + m - 1) // m) * m


def _pick_batch_tile(B, L, C, Cp, itemsize, budget_bytes=6 * 1024 * 1024):
    """Largest batch tile whose (tb, L, max(C, Cp)) block stays within ~budget.

    Grids use cdiv (Pallas pads the last block), so no exact-divisor shrinking.
    tb is capped so the grid has >= 2 steps when B >= 2 (megacore sharding).
    """
    per_batch = max(L * max(C, Cp) * itemsize, 1)
    tb = max(1, min(B, budget_bytes // per_batch))
    if B >= 2:
        tb = min(tb, -(-B // 2))
    return tb


# -------------------- fused my_Layernorm + projection kernel -----------------
def fused_norm_proj_kernel(x_ref, gamma_ref, beta_ref, w_ref, b_ref, o_ref):
    # x_ref: (tb, L, C); gamma/beta: (1, C); w: (C, Cp); b: (1, Cp); o: (tb, L, Cp)
    x = x_ref[...].astype(jnp.float32)
    gamma = gamma_ref[...].astype(jnp.float32)   # hoisted once per block
    beta = beta_ref[...].astype(jnp.float32)

    # LayerNorm over channels — two-pass variance (no E[x^2]-E[x]^2 cancellation).
    mean = jnp.mean(x, axis=-1, keepdims=True)
    xc = x - mean
    var = jnp.mean(xc * xc, axis=-1, keepdims=True)
    x_hat = xc * jax.lax.rsqrt(var + EPS) * gamma + beta

    # my_Layernorm: subtract the per-sequence mean (dim=1 of (B, L, C)).
    xn = x_hat - jnp.mean(x_hat, axis=1, keepdims=True)

    # Projection while the block is still resident: one (tb*L, C)x(C, Cp) matmul.
    tb, l, c = xn.shape
    cp = w_ref.shape[-1]
    acc = jnp.dot(xn.reshape(tb * l, c), w_ref[...].astype(jnp.float32),
                  preferred_element_type=jnp.float32)
    acc = acc + b_ref[...].astype(jnp.float32)
    o_ref[...] = acc.reshape(tb, l, cp).astype(o_ref.dtype)


def fused_norm_projection(x, gamma, beta, w, b):
    """my_Layernorm followed by nn.Linear, fused into one HBM pass.

    x: (B, L, C); gamma/beta: (C,); w: (C, C_out) (pre-transposed nn.Linear
    weight); b: (C_out,). Returns (B, L, C_out).
    """
    B, L, C = x.shape
    C_out = w.shape[1]
    Cp = _round_up(C_out, LANE)          # lane-dense output slab (no masked vst)
    if Cp != C_out:
        w = jnp.pad(w, ((0, 0), (0, Cp - C_out)))
        b = jnp.pad(b, (0, Cp - C_out))

    # TODO(synk): for very long sequences (L*C*4 beyond a few MiB on v7x's
    # 64 MiB VMEM), switch to an L-streamed scheme that accumulates the seq-sum
    # per L-tile in VMEM scratch and finalizes on the last L tile.

    itemsize = jnp.dtype(x.dtype).itemsize
    tb = _pick_batch_tile(B, L, C, Cp, itemsize)
    grid_b = pl.cdiv(B, tb)

    gamma2d = gamma.reshape(1, C)
    beta2d = beta.reshape(1, C)
    b2d = b.reshape(1, Cp)

    cost = pl.CostEstimate(
        flops=int(B * L * (10 * C + 2 * C * Cp)),
        transcendentals=int(B * L),
        bytes_accessed=int((B * L * (C + Cp) + C * Cp + Cp + 2 * C) * itemsize),
    )

    out = pl.pallas_call(
        fused_norm_proj_kernel,
        out_shape=jax.ShapeDtypeStruct((B, L, Cp), x.dtype),
        grid_spec=pltpu.PrefetchScalarGridSpec(
            num_scalar_prefetch=0,
            grid=(grid_b,),
            in_specs=[
                pl.BlockSpec((tb, L, C), lambda i: (i, 0, 0)),
                pl.BlockSpec((1, C), lambda i: (0, 0)),
                pl.BlockSpec((1, C), lambda i: (0, 0)),
                pl.BlockSpec((C, Cp), lambda i: (0, 0)),   # weight stays resident
                pl.BlockSpec((1, Cp), lambda i: (0, 0)),
            ],
            out_specs=pl.BlockSpec((tb, L, Cp), lambda i: (i, 0, 0)),
        ),
        compiler_params=pltpu.CompilerParams(
            dimension_semantics=("parallel",),
            vmem_limit_bytes=48 * 1024 * 1024,
        ),
        cost_estimate=cost,
    )(x, gamma2d, beta2d, w, b2d)

    if Cp != C_out:
        out = out[:, :, :C_out]
    return out


# ----------------------------- my_Layernorm (norm-only fallback) -------------
def my_layernorm_kernel(x_ref, gamma_ref, beta_ref, o_ref):
    x = x_ref[...].astype(jnp.float32)
    gamma = gamma_ref[...].astype(jnp.float32)
    beta = beta_ref[...].astype(jnp.float32)
    mean = jnp.mean(x, axis=-1, keepdims=True)
    xc = x - mean
    var = jnp.mean(xc * xc, axis=-1, keepdims=True)
    x_hat = xc * jax.lax.rsqrt(var + EPS) * gamma + beta
    o_ref[...] = (x_hat - jnp.mean(x_hat, axis=1, keepdims=True)).astype(o_ref.dtype)


def my_layernorm(x, gamma, beta):
    B, L, C = x.shape
    itemsize = jnp.dtype(x.dtype).itemsize
    tb = _pick_batch_tile(B, L, C, C, itemsize)
    grid_b = pl.cdiv(B, tb)
    gamma2d = gamma.reshape(1, C)
    beta2d = beta.reshape(1, C)
    cost = pl.CostEstimate(
        flops=int(10 * B * L * C),
        transcendentals=int(B * L),
        bytes_accessed=int((2 * B * L * C + 2 * C) * itemsize),
    )
    return pl.pallas_call(
        my_layernorm_kernel,
        out_shape=jax.ShapeDtypeStruct((B, L, C), x.dtype),
        grid_spec=pltpu.PrefetchScalarGridSpec(
            num_scalar_prefetch=0,
            grid=(grid_b,),
            in_specs=[
                pl.BlockSpec((tb, L, C), lambda b: (b, 0, 0)),
                pl.BlockSpec((1, C), lambda b: (0, 0)),
                pl.BlockSpec((1, C), lambda b: (0, 0)),
            ],
            out_specs=pl.BlockSpec((tb, L, C), lambda b: (b, 0, 0)),
        ),
        compiler_params=pltpu.CompilerParams(
            dimension_semantics=("parallel",),
            vmem_limit_bytes=48 * 1024 * 1024,
        ),
        cost_estimate=cost,
    )(x, gamma2d, beta2d)


# ----------------------------- projection (proj-only fallback) ---------------
def linear_kernel(x_ref, w_ref, b_ref, o_ref):
    acc = jnp.dot(x_ref[...], w_ref[...].astype(jnp.float32),
                  preferred_element_type=jnp.float32)
    o_ref[...] = (acc + b_ref[...].astype(jnp.float32)).astype(o_ref.dtype)


def linear_projection(x, w, b):
    """x: (B, L, C); w: (C, C_out) (pre-transposed nn.Linear weight); b: (C_out,)."""
    B, L, C = x.shape
    C_out = w.shape[1]
    Cp = _round_up(C_out, LANE)
    if Cp != C_out:
        w = jnp.pad(w, ((0, 0), (0, Cp - C_out)))
        b = jnp.pad(b, (0, Cp - C_out))
    M = B * L
    x2 = x.reshape(M, C)
    b2 = b.reshape(1, Cp)
    itemsize = jnp.dtype(x.dtype).itemsize

    tm = M if M <= 512 else 512         # weight is resident; big M tiles amortize step overhead
    grid_m = pl.cdiv(M, tm)
    cost = pl.CostEstimate(
        flops=int(2 * M * C * Cp),
        transcendentals=0,
        bytes_accessed=int((M * (C + Cp) + C * Cp + Cp) * itemsize),
    )

    out2 = pl.pallas_call(
        linear_kernel,
        out_shape=jax.ShapeDtypeStruct((M, Cp), x.dtype),
        grid=(grid_m,),
        in_specs=[
            pl.BlockSpec((tm, C), lambda i: (i, 0)),
            pl.BlockSpec((C, Cp), lambda i: (0, 0)),
            pl.BlockSpec((1, Cp), lambda i: (0, 0)),
        ],
        out_specs=pl.BlockSpec((tm, Cp), lambda i: (i, 0)),
        compiler_params=pltpu.CompilerParams(
            dimension_semantics=("parallel",),
            vmem_limit_bytes=48 * 1024 * 1024,
        ),
        cost_estimate=cost,
    )(x2, w, b2)
    out = out2.reshape(B, L, Cp)
    if Cp != C_out:
        out = out[:, :, :C_out]
    return out


# ----------------------------- Decoder forward --------------------------------
def decoder_forward(x, cross, trend, layers=(), norm_params=None, proj_params=None):
    """Mirrors Decoder.forward: layers -> (optional) norm -> (optional) projection."""
    # TODO(synk): DecoderLayer internals (AutoCorrelation attention, conv FF,
    # series decomposition) are not defined in this module; layers are applied
    # as opaque callables.
    for layer in layers:
        x, residual_trend = layer(x, cross)
        trend = trend + residual_trend
    if norm_params is not None and proj_params is not None:
        # Fused path: norm + projection in a single HBM pass.
        gamma, beta = norm_params
        w, b = proj_params
        x = fused_norm_projection(x, gamma, beta, w, b)
    elif norm_params is not None:
        x = my_layernorm(x, *norm_params)
    elif proj_params is not None:
        x = linear_projection(x, *proj_params)
    return x, trend


# ----------------------------- pure-JAX references ----------------------------
def my_layernorm_ref(x, gamma, beta):
    xf = x.astype(jnp.float32)
    mean = jnp.mean(xf, axis=-1, keepdims=True)
    var = jnp.mean((xf - mean) ** 2, axis=-1, keepdims=True)
    x_hat = (xf - mean) / jnp.sqrt(var + EPS)
    x_hat = x_hat * gamma + beta
    bias = jnp.mean(x_hat, axis=1, keepdims=True)
    return (x_hat - bias).astype(x.dtype)


def decoder_forward_ref(x, trend, gamma, beta, w, b):
    xn = my_layernorm_ref(x, gamma, beta)
    xp = (xn.astype(jnp.float32) @ w.astype(jnp.float32) + b).astype(x.dtype)
    return xp, trend


# ----------------------------- test ------------------------------------------
if __name__ == "__main__":
    key = jax.random.PRNGKey(0)
    kx, kc, kt, kg, kb, kw, kpb = jax.random.split(key, 7)

    B, L, C, C_OUT = 4, 16, 128, 128  # lane-dense channels (real d_model is 512+)
    x = jax.random.normal(kx, (B, L, C), dtype=jnp.float32)
    cross = jax.random.normal(kc, (B, L, C), dtype=jnp.float32)  # unused: no layers supplied
    trend = jax.random.normal(kt, (B, L, C_OUT), dtype=jnp.float32)

    gamma = jnp.ones((C,), jnp.float32) + 0.1 * jax.random.normal(kg, (C,), jnp.float32)
    beta = 0.1 * jax.random.normal(kb, (C,), jnp.float32)
    proj_w = 0.05 * jax.random.normal(kw, (C, C_OUT), dtype=jnp.float32)  # nn.Linear weight, pre-transposed
    proj_b = 0.05 * jax.random.normal(kpb, (C_OUT,), dtype=jnp.float32)

    out, out_trend = decoder_forward(
        x, cross, trend,
        layers=(),
        norm_params=(gamma, beta),
        proj_params=(proj_w, proj_b),
    )
    out = jax.block_until_ready(out)
    out_trend = jax.block_until_ready(out_trend)

    ref, ref_trend = decoder_forward_ref(x, trend, gamma, beta, proj_w, proj_b)
    assert out.shape == (B, L, C_OUT)
    assert jnp.allclose(out, ref, atol=1e-4, rtol=1e-4), "mismatch vs reference (fused norm+proj)"
    assert jnp.allclose(out_trend, ref_trend, atol=1e-5, rtol=1e-5), "mismatch vs reference (trend)"

    # Also exercise the lane-padded small-c_out path (real Autoformer c_out ~ 7).
    C_OUT_SMALL = 7
    kw2, kpb2 = jax.random.split(kw)
    w_small = 0.05 * jax.random.normal(kw2, (C, C_OUT_SMALL), dtype=jnp.float32)
    b_small = 0.05 * jax.random.normal(kpb2, (C_OUT_SMALL,), dtype=jnp.float32)
    out_small = jax.block_until_ready(fused_norm_projection(x, gamma, beta, w_small, b_small))
    ref_small, _ = decoder_forward_ref(x, trend, gamma, beta, w_small, b_small)
    assert out_small.shape == (B, L, C_OUT_SMALL)
    assert jnp.allclose(out_small, ref_small, atol=1e-4, rtol=1e-4), "mismatch vs reference (small c_out)"

    print("KERNEL_OK")
</pallas_src>

<mosaic_0001>
module attributes {stable_mosaic.version = 11 : i64} {
  func.func @fused_norm_proj_kernel(%arg0: i32, %arg1: memref<2x16x128xf32, #tpu.memory_space<vmem>>, %arg2: memref<1x128xf32, #tpu.memory_space<vmem>>, %arg3: memref<1x128xf32, #tpu.memory_space<vmem>>, %arg4: memref<128x128xf32, #tpu.memory_space<vmem>>, %arg5: memref<1x128xf32, #tpu.memory_space<vmem>>, %arg6: memref<2x16x128xf32, #tpu.memory_space<vmem>>) attributes {dimension_semantics = [#tpu.dimension_semantics<parallel>], iteration_bounds = array<i64: 2>, scalar_prefetch = 0 : i64, scratch_operands = 0 : i64, tpu.core_type = #tpu.core_type<tc>, window_params = [{transform_indices = @transform_0, window_bounds = array<i64: 2, 16, 128>}, {pipeline_mode = #tpu.pipeline_mode<synchronous>, transform_indices = @transform_1, window_bounds = array<i64: 1, 128>}, {pipeline_mode = #tpu.pipeline_mode<synchronous>, transform_indices = @transform_2, window_bounds = array<i64: 1, 128>}, {pipeline_mode = #tpu.pipeline_mode<synchronous>, transform_indices = @transform_3, window_bounds = array<i64: 128, 128>}, {pipeline_mode = #tpu.pipeline_mode<synchronous>, transform_indices = @transform_4, window_bounds = array<i64: 1, 128>}, {transform_indices = @transform_5, window_bounds = array<i64: 2, 16, 128>}]} {
    %c0 = arith.constant 0 : index
    %c0_0 = arith.constant 0 : index
    %c0_1 = arith.constant 0 : index
    %0 = vector.load %arg1[%c0, %c0_0, %c0_1] : memref<2x16x128xf32, #tpu.memory_space<vmem>>, vector<2x16x128xf32>
    %c0_2 = arith.constant 0 : index
    %c0_3 = arith.constant 0 : index
    %1 = vector.load %arg2[%c0_2, %c0_3] : memref<1x128xf32, #tpu.memory_space<vmem>>, vector<1x128xf32>
    %c0_4 = arith.constant 0 : index
    %c0_5 = arith.constant 0 : index
    %2 = vector.load %arg3[%c0_4, %c0_5] : memref<1x128xf32, #tpu.memory_space<vmem>>, vector<1x128xf32>
    %cst = arith.constant dense<0.000000e+00> : vector<2x16xf32>
    %3 = vector.multi_reduction <add>, %0, %cst [2] : vector<2x16x128xf32> to vector<2x16xf32>
    %4 = vector.shape_cast %3 : vector<2x16xf32> to vector<2x16x1xf32>
    %cst_6 = arith.constant 1.280000e+02 : f32
    %5 = vector.broadcast %cst_6 : f32 to vector<2x16x1xf32>
    %6 = arith.divf %4, %5 : vector<2x16x1xf32>
    %7 = vector.broadcast %6 : vector<2x16x1xf32> to vector<2x16x128xf32>
    %8 = arith.subf %0, %7 : vector<2x16x128xf32>
    %9 = arith.mulf %8, %8 : vector<2x16x128xf32>
    %cst_7 = arith.constant dense<0.000000e+00> : vector<2x16xf32>
    %10 = vector.multi_reduction <add>, %9, %cst_7 [2] : vector<2x16x128xf32> to vector<2x16xf32>
    %11 = vector.shape_cast %10 : vector<2x16xf32> to vector<2x16x1xf32>
    %cst_8 = arith.constant 1.280000e+02 : f32
    %12 = vector.broadcast %cst_8 : f32 to vector<2x16x1xf32>
    %13 = arith.divf %11, %12 : vector<2x16x1xf32>
    %cst_9 = arith.constant 9.99999974E-6 : f32
    %14 = vector.broadcast %cst_9 : f32 to vector<2x16x1xf32>
    %15 = arith.addf %13, %14 : vector<2x16x1xf32>
    %16 = math.rsqrt %15 : vector<2x16x1xf32>
    %17 = vector.broadcast %16 : vector<2x16x1xf32> to vector<2x16x128xf32>
    %18 = arith.mulf %8, %17 : vector<2x16x128xf32>
    %19 = vector.shape_cast %1 : vector<1x128xf32> to vector<1x1x128xf32>
    %20 = vector.broadcast %19 : vector<1x1x128xf32> to vector<2x16x128xf32>
    %21 = arith.mulf %18, %20 : vector<2x16x128xf32>
    %22 = vector.shape_cast %2 : vector<1x128xf32> to vector<1x1x128xf32>
    %23 = vector.broadcast %22 : vector<1x1x128xf32> to vector<2x16x128xf32>
    %24 = arith.addf %21, %23 : vector<2x16x128xf32>
    %cst_10 = arith.constant dense<0.000000e+00> : vector<2x128xf32>
    %25 = vector.multi_reduction <add>, %24, %cst_10 [1] : vector<2x16x128xf32> to vector<2x128xf32>
    %26 = vector.shape_cast %25 : vector<2x128xf32> to vector<2x1x128xf32>
    %cst_11 = arith.constant 1.600000e+01 : f32
    %27 = vector.broadcast %cst_11 : f32 to vector<2x1x128xf32>
    %28 = arith.divf %26, %27 : vector<2x1x128xf32>
    %29 = vector.broadcast %28 : vector<2x1x128xf32> to vector<2x16x128xf32>
    %30 = arith.subf %24, %29 : vector<2x16x128xf32>
    %31 = vector.shape_cast %30 : vector<2x16x128xf32> to vector<32x128xf32>
    %c0_12 = arith.constant 0 : index
    %c0_13 = arith.constant 0 : index
    %32 = vector.load %arg4[%c0_12, %c0_13] : memref<128x128xf32, #tpu.memory_space<vmem>>, vector<128x128xf32>
    %cst_14 = arith.constant dense<0.000000e+00> : vector<32x128xf32>
    %33 = tpu.matmul %31, %32, %cst_14 {dimension_numbers = #tpu.dot_dimension_numbers<[1], [0], [0], [1], [0, 0, 1, 1], [], []>} : vector<32x128xf32>, vector<128x128xf32>, vector<32x128xf32> -> vector<32x128xf32>
    %c0_15 = arith.constant 0 : index
    %c0_16 = arith.constant 0 : index
    %34 = vector.load %arg5[%c0_15, %c0_16] : memref<1x128xf32, #tpu.memory_space<vmem>>, vector<1x128xf32>
    %35 = vector.broadcast %34 : vector<1x128xf32> to vector<32x128xf32>
    %36 = arith.addf %33, %35 : vector<32x128xf32>
    %37 = vector.shape_cast %36 : vector<32x128xf32> to vector<2x16x128xf32>
    %c0_17 = arith.constant 0 : index
    %c0_18 = arith.constant 0 : index
    %c0_19 = arith.constant 0 : index
    %38 = vector.load %arg6[%c0_17, %c0_18, %c0_19] : memref<2x16x128xf32, #tpu.memory_space<vmem>>, vector<2x16x128xf32>
    tpu.vector_store %arg6[%c0_17, %c0_18, %c0_19], %37 {strides = array<i32>} : memref<2x16x128xf32, #tpu.memory_space<vmem>>, vector<2x16x128xf32>,
    return
  }
  func.func @transform_0(%arg0: i32) -> (i32, i32, i32) {
    %c0_i32 = arith.constant 0 : i32
    %c0_i32_0 = arith.constant 0 : i32
    %c0_i32_1 = arith.constant 0 : i32
    return %arg0, %c0_i32, %c0_i32_0 : i32, i32, i32
  }
  func.func @transform_1(%arg0: i32) -> (i32, i32) {
    %c0_i32 = arith.constant 0 : i32
    %c0_i32_0 = arith.constant 0 : i32
    %c0_i32_1 = arith.constant 0 : i32
    return %c0_i32, %c0_i32_0 : i32, i32
  }
  func.func @transform_2(%arg0: i32) -> (i32, i32) {
    %c0_i32 = arith.constant 0 : i32
    %c0_i32_0 = arith.constant 0 : i32
    %c0_i32_1 = arith.constant 0 : i32
    return %c0_i32, %c0_i32_0 : i32, i32
  }
  func.func @transform_3(%arg0: i32) -> (i32, i32) {
    %c0_i32 = arith.constant 0 : i32
    %c0_i32_0 = arith.constant 0 : i32
    %c0_i32_1 = arith.constant 0 : i32
    return %c0_i32, %c0_i32_0 : i32, i32
  }
  func.func @transform_4(%arg0: i32) -> (i32, i32) {
    %c0_i32 = arith.constant 0 : i32
    %c0_i32_0 = arith.constant 0 : i32
    %c0_i32_1 = arith.constant 0 : i32
    return %c0_i32, %c0_i32_0 : i32, i32
  }
  func.func @transform_5(%arg0: i32) -> (i32, i32, i32) {
    %c0_i32 = arith.constant 0 : i32
    %c0_i32_0 = arith.constant 0 : i32
    %c0_i32_1 = arith.constant 0 : i32
    return %arg0, %c0_i32, %c0_i32_0 : i32, i32, i32
  }
}

</mosaic_0001>

<llo_original>
// kernel: tpu_custom_call.1
$region0: #{tpu_custom_call.1}
  #allocation0 [shape = 'u32[]', space=smem, size = 0x4, offset = 0x4, fixed_abs, tag = 'smem constant byte address 0x4 - core index']
  #allocation1 [shape = 'u32[144,128]{1,0:T(1,128)}', space=vmem, size = 0x12000, scoped, tag = 'internal scratch']
  %s0 = inlined_call_operand.hbm [shape: f32[4,16,128], index: 0, kind: input, shape index: {}]
  %s1 = inlined_call_operand.vmem [shape: f32[1,128], index: 1, kind: input, shape index: {}]
  %s2 = inlined_call_operand.vmem [shape: f32[1,128], index: 2, kind: input, shape index: {}]
  %s3 = inlined_call_operand.hbm [shape: f32[128,128], index: 3, kind: input, shape index: {}]
  %s4 = inlined_call_operand.vmem [shape: f32[1,128], index: 4, kind: input, shape index: {}]
  %s5 = inlined_call_operand.hbm [shape: f32[4,16,128], index: 5, kind: output, shape index: {}]
  %s6 = sld [smem:[#allocation0]]
  $region61: #{tpu_custom_call.1} parent=0
    _
  %s8 = ssub.s32 1, %s6
  %s9 = scalar_select 0, %s8, %s6
  $region1: #{tpu_custom_call.1} parent=0
    #allocation2 [shape = 'u8[32768]{0}', space=vmem, size = 0x8000, scoped, tag = 'input window, operand 0']
    #allocation3 [shape = 's32[2]{0}', space=sflag, size = 0x8, scoped, tag = 'scoped memory for tpu_custom_call.1']
    #allocation4 [shape = 's32[2]{0}', space=sflag, size = 0x8, scoped, tag = 'scoped memory for tpu_custom_call.1']
    #allocation5 [shape = 'u8[65536]{0}', space=vmem, size = 0x10000, scoped, tag = 'input window, operand 3, single buffered']
    #allocation6 [shape = 's32[1]{0}', space=sflag, size = 0x4, scoped, tag = 'scoped memory for tpu_custom_call.1']
    #allocation7 [shape = 'u8[32768]{0}', space=vmem, size = 0x8000, scoped, tag = 'output window, operand 0']
    %10 = vsyncpa [#allocation3], 0
    %s11 = scalar_lea.sflag [#allocation3], 1
    %12 = vsyncpa %s11, 0
    %13 = vsyncpa [#allocation6], 0
    %14 = vsyncpa [#allocation4], 0
    %s15 = scalar_lea.sflag [#allocation4], 1
    %16 = vsyncpa %s15, 0
    loop: start=0, step=1, limit=4
    $region2: #{tpu_custom_call.1} parent=1 // loop_pre_header
      _
    $region3: #{tpu_custom_call.1} parent=1 // loop_header
      %s18 = sphi 0, %s22
      %p19 = scmp.ge.s32.totalorder %s18, 4
      %s28 = sphi 0, %s30
      %s31 = sphi 0, %s28
      %s32 = sphi 0, %s31
      %s48 = sphi 0, %s32
      %s52 = sphi 0, %s52
      %s54 = sphi 0, %s52
      %s55 = sphi 0, %s54
      %s69 = sphi 0, %s55
      %s73 = sphi 0, %s73
      %s75 = sphi 0, %s73
      %s76 = sphi 0, %s75
      %s90 = sphi 0, %s76
      %s94 = sphi 0, %s94
      %s96 = sphi 0, %s94
      %s97 = sphi 0, %s96
      %s111 = sphi 0, %s97
      %s115 = sphi 0, %s115
      %s117 = sphi 0, %s115
      %s118 = sphi 0, %s117
      %s132 = sphi 0, %s118
      %s138 = sphi 0, %s140
      %s141 = sphi 0, %s138
      %s142 = sphi 0, %s141
      %s158 = sphi 0, %s142
    $region4: #{tpu_custom_call.1} parent=1 // loop_header_branch
      %21 = sbr.rel (%p19) target = $region8
    $region5: #{tpu_custom_call.1} parent=1 // loop_body
      %s23 = ssub.s32 %s18, 1
      %s24 = ssub.s32 %s18, 2
      %s25 = sadd.s32 %s18, 1
      %s26 = ssub.s32 %s18, %s25
      %p27 = scmp.eq.s32.totalorder %s26, 0
      %s29 = sadd.s32 %s28, 1
      %s30 = scalar_select %p27, %s28, %s29
      %p33 = pneg %p27
      %p34 = scmp.eq.s32.totalorder %s18, 1
      %p35 = por %p33, %p34
      %p36 = scmp.ne.s32.totalorder %s28, %s31
      %p37 = scmp.eq.s32.totalorder %s18, 0
      %p38 = por %p36, %p37
      %p39 = scmp.ne.s32.totalorder %s28, %s31
      %p40 = scmp.eq.s32.totalorder %s23, 1
      %p41 = por %p39, %p40
      %p42 = scmp.ne.s32.totalorder %s31, %s32
      %p43 = scmp.eq.s32.totalorder %s23, 0
      %p44 = por %p42, %p43
      %p45 = scmp.ne.s32.totalorder %s31, %s32
      %p46 = scmp.eq.s32.totalorder %s24, 1
      %p47 = por %p45, %p46
      %p49 = scmp.ne.s32.totalorder %s32, %s48
      %p50 = scmp.eq.s32.totalorder %s24, 0
      %p51 = por %p49, %p50
      %s53 = sadd.s32 %s52, 1
      %p56 = scmp.eq.s32.totalorder %s18, 1
      %p57 = scmp.ne.s32.totalorder %s52, %s54
      %p58 = scmp.eq.s32.totalorder %s18, 0
      %p59 = por %p57, %p58
      %p60 = scmp.ne.s32.totalorder %s52, %s54
      %p61 = scmp.eq.s32.totalorder %s23, 1
      %p62 = por %p60, %p61
      %p63 = scmp.ne.s32.totalorder %s54, %s55
      %p64 = scmp.eq.s32.totalorder %s23, 0
      %p65 = por %p63, %p64
      %p66 = scmp.ne.s32.totalorder %s54, %s55
      %p67 = scmp.eq.s32.totalorder %s24, 1
      %p68 = por %p66, %p67
      %p70 = scmp.ne.s32.totalorder %s55, %s69
      %p71 = scmp.eq.s32.totalorder %s24, 0
      %p72 = por %p70, %p71
      %s74 = sadd.s32 %s73, 1
      %p77 = scmp.eq.s32.totalorder %s18, 1
      %p78 = scmp.ne.s32.totalorder %s73, %s75
      %p79 = scmp.eq.s32.totalorder %s18, 0
      %p80 = por %p78, %p79
      %p81 = scmp.ne.s32.totalorder %s73, %s75
      %p82 = scmp.eq.s32.totalorder %s23, 1
      %p83 = por %p81, %p82
      %p84 = scmp.ne.s32.totalorder %s75, %s76
      %p85 = scmp.eq.s32.totalorder %s23, 0
      %p86 = por %p84, %p85
      %p87 = scmp.ne.s32.totalorder %s75, %s76
      %p88 = scmp.eq.s32.totalorder %s24, 1
      %p89 = por %p87, %p88
      %p91 = scmp.ne.s32.totalorder %s76, %s90
      %p92 = scmp.eq.s32.totalorder %s24, 0
      %p93 = por %p91, %p92
      %s95 = sadd.s32 %s94, 1
      %p98 = scmp.eq.s32.totalorder %s18, 1
      %p99 = scmp.ne.s32.totalorder %s94, %s96
      %p100 = scmp.eq.s32.totalorder %s18, 0
      %p101 = por %p99, %p100
      %p102 = scmp.ne.s32.totalorder %s94, %s96
      %p103 = scmp.eq.s32.totalorder %s23, 1
      %p104 = por %p102, %p103
      %p105 = scmp.ne.s32.totalorder %s96, %s97
      %p106 = scmp.eq.s32.totalorder %s23, 0
      %p107 = por %p105, %p106
      %p108 = scmp.ne.s32.totalorder %s96, %s97
      %p109 = scmp.eq.s32.totalorder %s24, 1
      %p110 = por %p108, %p109
      %p112 = scmp.ne.s32.totalorder %s97, %s111
      %p113 = scmp.eq.s32.totalorder %s24, 0
      %p114 = por %p112, %p113
      %s116 = sadd.s32 %s115, 1
      %p119 = scmp.eq.s32.totalorder %s18, 1
      %p120 = scmp.ne.s32.totalorder %s115, %s117
      %p121 = scmp.eq.s32.totalorder %s18, 0
      %p122 = por %p120, %p121
      %p123 = scmp.ne.s32.totalorder %s115, %s117
      %p124 = scmp.eq.s32.totalorder %s23, 1
      %p125 = por %p123, %p124
      %p126 = scmp.ne.s32.totalorder %s117, %s118
      %p127 = scmp.eq.s32.totalorder %s23, 0
      %p128 = por %p126, %p127
      %p129 = scmp.ne.s32.totalorder %s117, %s118
      %p130 = scmp.eq.s32.totalorder %s24, 1
      %p131 = por %p129, %p130
      %p133 = scmp.ne.s32.totalorder %s118, %s132
      %p134 = scmp.eq.s32.totalorder %s24, 0
      %p135 = por %p133, %p134
      %s136 = ssub.s32 %s18, %s25
      %p137 = scmp.eq.s32.totalorder %s136, 0
      %s139 = sadd.s32 %s138, 1
      %s140 = scalar_select %p137, %s138, %s139
      %p143 = pneg %p137
      %p144 = scmp.eq.s32.totalorder %s18, 1
      %p145 = por %p143, %p144
      %p146 = scmp.ne.s32.totalorder %s138, %s141
      %p147 = scmp.eq.s32.totalorder %s18, 0
      %p148 = por %p146, %p147
      %p149 = scmp.ne.s32.totalorder %s138, %s141
      %p150 = scmp.eq.s32.totalorder %s23, 1
      %p151 = por %p149, %p150
      %p152 = scmp.ne.s32.totalorder %s141, %s142
      %p153 = scmp.eq.s32.totalorder %s23, 0
      %p154 = por %p152, %p153
      %p155 = scmp.ne.s32.totalorder %s141, %s142
      %p156 = scmp.eq.s32.totalorder %s24, 1
      %p157 = por %p155, %p156
      %p159 = scmp.ne.s32.totalorder %s142, %s158
      %p160 = scmp.eq.s32.totalorder %s24, 0
      %p161 = por %p159, %p160
      %p162 = scmp.le.s32.totalorder 1, %s18
      %p163 = scmp.lt.s32.totalorder %s18, 3
      %p164 = pnand %p162, %p163
      %p165 = pneg %p164
      // Predicated region
      $region9: #{tpu_custom_call.1} parent=5 // pred_check
        _
      $region10: #{tpu_custom_call.1} parent=5 // pred_check_branch
        %167 = sbr.rel (%p164) target = $region12
      $region11: #{tpu_custom_call.1} parent=5 // pred_region
        %s168 = ssub.s32 %s18, 1
        // Predicated region
        $region13: #{tpu_custom_call.1} parent=11 // pred_check
          %p169 = pneg %p65
        $region14: #{tpu_custom_call.1} parent=11 // pred_check_branch
          %171 = sbr.rel (%p169) target = $region16
        $region15: #{tpu_custom_call.1} parent=11 // pred_region
          _
        $region16: #{tpu_custom_call.1} parent=11 // pred_fallthru
          _
        // Predicated region
        $region17: #{tpu_custom_call.1} parent=11 // pred_check
          %p172 = pneg %p86
        $region18: #{tpu_custom_call.1} parent=11 // pred_check_branch
          %174 = sbr.rel (%p172) target = $region20
        $region19: #{tpu_custom_call.1} parent=11 // pred_region
          _
        $region20: #{tpu_custom_call.1} parent=11 // pred_fallthru
          _
        // Predicated region
        $region21: #{tpu_custom_call.1} parent=11 // pred_check
          %p175 = pneg %p107
        $region22: #{tpu_custom_call.1} parent=11 // pred_check_branch
          %177 = sbr.rel (%p175) target = $region24
        $region23: #{tpu_custom_call.1} parent=11 // pred_region
          %s179 = ssub.s32 2048, 2048
          %180 = vsyncadd [#allocation6], %s179
          %s181 = sshll.u32 [#allocation5], 4
          %s182 = int_to_ptr.vmem [resolvable:$true] %s181
          %187 = dma.hbm_to_vmem [thread:$0]  %s3, 2048, %s182, [#allocation6], 128, 128, 8
        $region24: #{tpu_custom_call.1} parent=11 // pred_fallthru
          _
        // Predicated region
        $region25: #{tpu_custom_call.1} parent=11 // pred_check
          %p188 = pneg %p128
        $region26: #{tpu_custom_call.1} parent=11 // pred_check_branch
          %190 = sbr.rel (%p188) target = $region28
        $region27: #{tpu_custom_call.1} parent=11 // pred_region
          _
        $region28: #{tpu_custom_call.1} parent=11 // pred_fallthru
          _
      $region12: #{tpu_custom_call.1} parent=5 // pred_fallthru
        _
      %p191 = scmp.lt.s32.totalorder %s18, 2
      // Predicated region
      $region29: #{tpu_custom_call.1} parent=5 // pred_check
        %p192 = pneg %p191
      $region30: #{tpu_custom_call.1} parent=5 // pred_check_branch
        %194 = sbr.rel (%p192) target = $region32
      $region31: #{tpu_custom_call.1} parent=5 // pred_region
        // Predicated region
        $region33: #{tpu_custom_call.1} parent=31 // pred_check
          %p195 = pneg %p38
        $region34: #{tpu_custom_call.1} parent=31 // pred_check_branch
          %197 = sbr.rel (%p195) target = $region36
        $region35: #{tpu_custom_call.1} parent=31 // pred_region
          %s198 = sand.u32 %s28, 1
          %s199 = scalar_lea.sflag [#allocation3], %s198
          %s200 = sand.u32 %s28, 1
          %s201 = smul.addr %s200, 32
          %s202 = scalar_lea.vmem [#allocation2], %s201
          %s203 = smul.u32 2, %s18
          %s205 = ssub.s32 512, 512
          %206 = vsyncadd %s199, %s205
          %s207 = smul.addr %s203, 2
          %s208 = smul.addr %s207, 128
          %s209 = scalar_lea.hbm %s0, %s208
          %s210 = sshll.u32 %s202, 4
          %s211 = int_to_ptr.vmem [resolvable:$true] %s210
          %216 = dma.hbm_to_vmem [thread:$0]  %s209, 512, %s211, %s199, 128, 128, 8
        $region36: #{tpu_custom_call.1} parent=31 // pred_fallthru
          _
      $region32: #{tpu_custom_call.1} parent=5 // pred_fallthru
        _
      %p217 = scmp.le.s32.totalorder 1, %s18
      %p218 = scmp.lt.s32.totalorder %s18, 3
      %p219 = pnand %p217, %p218
      %p220 = pneg %p219
      // Predicated region
      $region37: #{tpu_custom_call.1} parent=5 // pred_check
        _
      $region38: #{tpu_custom_call.1} parent=5 // pred_check_branch
        %222 = sbr.rel (%p219) target = $region40
      $region39: #{tpu_custom_call.1} parent=5 // pred_region
        %s223 = ssub.s32 %s18, 1
        %s224 = sand.u32 %s31, 1
        %s225 = scalar_lea.sflag [#allocation3], %s224
        %s226 = sand.u32 %s31, 1
        %s227 = smul.addr %s226, 32
        %s228 = scalar_lea.vmem [#allocation2], %s227
        // Predicated region
        $region41: #{tpu_custom_call.1} parent=39 // pred_check
          %p229 = pneg %p44
        $region42: #{tpu_custom_call.1} parent=39 // pred_check_branch
          %231 = sbr.rel (%p229) target = $region44
        $region43: #{tpu_custom_call.1} parent=39 // pred_region
          %232 = dma.done %s225, 512
        $region44: #{tpu_custom_call.1} parent=39 // pred_fallthru
          _
        // Predicated region
        $region45: #{tpu_custom_call.1} parent=39 // pred_check
          %p233 = pneg %p107
        $region46: #{tpu_custom_call.1} parent=39 // pred_check_branch
          %235 = sbr.rel (%p233) target = $region48
        $region47: #{tpu_custom_call.1} parent=39 // pred_region
          %236 = dma.done [#allocation6], 2048
        $region48: #{tpu_custom_call.1} parent=39 // pred_fallthru
          _
        %s237 = sand.u32 %s31, 1
        %s238 = scalar_lea.sflag [#allocation3], %s237
        %s239 = sand.u32 %s31, 1
        %s240 = smul.addr %s239, 32
        %s241 = scalar_lea.vmem [#allocation2], %s240
        %p242 = pneg %p44
        %p243 = pneg %p41
        %p244 = pneg %p65
        %p245 = pneg %p62
        %p246 = pneg %p86
        %p247 = pneg %p83
        %p248 = pneg %p107
        %p249 = pneg %p104
        %p250 = pneg %p128
        %p251 = pneg %p125
        %p252 = pneg %p154
        %p253 = pneg %p151
        %s254 = sand.u32 %s141, 1
        %s255 = scalar_lea.sflag [#allocation4], %s254
        %s256 = sand.u32 %s141, 1
        %s257 = smul.addr %s256, 32
        %s258 = scalar_lea.vmem [#allocation7], %s257
        %s259 = smul.u32 2, %s23
        %s260 = smul.u32 2, %s23
        %v261 = vld [vmem:[%s228] sm:$0xff]
        %v262 = vld [vmem:[%s228 + $0x8] sm:$0xff]
        %v263 = vld [vmem:[%s228 + $0x10] sm:$0xff]
        %v264 = vld [vmem:[%s228 + $0x18] sm:$0xff]
        %v265 = vld [vmem:[%s1] sm:$0x1]
        %v266 = vld [vmem:[%s2] sm:$0x1]
        %267 = vadd.xlane.f32.xlu0 %v261
        %v268 = vpop.xlane.xlu0 %267
        %269 = vadd.xlane.f32.xlu0 %v262
        %v270 = vpop.xlane.xlu0 %269
        %271 = vadd.xlane.f32.xlu0 %v263
        %v272 = vpop.xlane.xlu0 %271
        %273 = vadd.xlane.f32.xlu0 %v264
        %v274 = vpop.xlane.xlu0 %273
        %v275 = vrcp.pop 128.0
        %v276 = vmul.f32 %v268, %v275
        %v277 = vmul.f32 %v270, %v275
        %v278 = vmul.f32 %v272, %v275
        %v279 = vmul.f32 %v274, %v275
        %v280 = vsub.f32 %v261, %v276
        %v281 = vsub.f32 %v262, %v277
        %v282 = vsub.f32 %v263, %v278
        %v283 = vsub.f32 %v264, %v279
        %v284 = vmul.f32 %v280, %v280
        %v285 = vmul.f32 %v281, %v281
        %v286 = vmul.f32 %v282, %v282
        %v287 = vmul.f32 %v283, %v283
        %288 = vadd.xlane.f32.xlu0 %v284
        %v289 = vpop.xlane.xlu0 %288
        %290 = vadd.xlane.f32.xlu0 %v285
        %v291 = vpop.xlane.xlu0 %290
        %292 = vadd.xlane.f32.xlu0 %v286
        %v293 = vpop.xlane.xlu0 %292
        %294 = vadd.xlane.f32.xlu0 %v287
        %v295 = vpop.xlane.xlu0 %294
        %v296 = vmul.f32 %v289, %v275
        %v297 = vmul.f32 %v291, %v275
        %v298 = vmul.f32 %v293, %v275
        %v299 = vmul.f32 %v295, %v275
        %v300 = vadd.f32 %v296, 1e-05
        %v301 = vadd.f32 %v297, 1e-05
        %v302 = vadd.f32 %v298, 1e-05
        %v303 = vadd.f32 %v299, 1e-05
        %v304 = vrsqrt.pop %v300
        %v305 = vrsqrt.pop %v301
        %v306 = vrsqrt.pop %v302
        %v307 = vrsqrt.pop %v303
        %v308 = vmul.f32 %v280, %v304
        %v309 = vmul.f32 %v281, %v305
        %v310 = vmul.f32 %v282, %v306
        %v311 = vmul.f32 %v283, %v307
        %v313 = vlaneseq
        %v314 = vshrl.u32 %v313, 7
        %v315 = vsub.s32 0, %v314
        %v316 = vrot.slane %v265, %v315
        %v318 = vmul.f32 %v308, %v316
        %v319 = vmul.f32 %v309, %v316
        %v320 = vmul.f32 %v310, %v316
        %v321 = vmul.f32 %v311, %v316
        %v323 = vlaneseq
        %v324 = vshrl.u32 %v323, 7
        %v325 = vsub.s32 0, %v324
        %v326 = vrot.slane %v266, %v325
        %v328 = vadd.f32 %v318, %v326
        %v329 = vadd.f32 %v319, %v326
        %v330 = vadd.f32 %v320, %v326
        %v331 = vadd.f32 %v321, %v326
        %v332 = vadd.f32 %v328, %v329
        %v333 = vrot.slane %v332, 4
        %v334 = vadd.f32 %v332, %v333
        %v335 = vrot.slane %v334, 2
        %v336 = vadd.f32 %v334, %v335
        %v337 = vrot.slane %v336, 1
        %v338 = vadd.f32 %v336, %v337
        %v339 = vadd.f32 %v330, %v331
        %v340 = vrot.slane %v339, 4
        %v341 = vadd.f32 %v339, %v340
        %v342 = vrot.slane %v341, 2
        %v343 = vadd.f32 %v341, %v342
        %v344 = vrot.slane %v343, 1
        %v345 = vadd.f32 %v343, %v344
        %v346 = vrcp.pop 16.0
        %v347 = vmul.f32 %v338, %v346
        %v348 = vmul.f32 %v345, %v346
        %v349 = vsub.f32 %v328, %v347
        %v350 = vsub.f32 %v329, %v347
        %v351 = vsub.f32 %v330, %v348
        %v352 = vsub.f32 %v331, %v348
        %v353 = vld [vmem:[#allocation5] sm:$0xff]
        %v354 = vld [vmem:[#allocation5 + $0x8] sm:$0xff]
        %v355 = vld [vmem:[#allocation5 + $0x10] sm:$0xff]
        %v356 = vld [vmem:[#allocation5 + $0x18] sm:$0xff]
        %v357 = vld [vmem:[#allocation5 + $0x20] sm:$0xff]
        %v358 = vld [vmem:[#allocation5 + $0x28] sm:$0xff]
        %v359 = vld [vmem:[#allocation5 + $0x30] sm:$0xff]
        %v360 = vld [vmem:[#allocation5 + $0x38] sm:$0xff]
        %v361 = vld [vmem:[#allocation5 + $0x40] sm:$0xff]
        %v362 = vld [vmem:[#allocation5 + $0x48] sm:$0xff]
        %v363 = vld [vmem:[#allocation5 + $0x50] sm:$0xff]
        %v364 = vld [vmem:[#allocation5 + $0x58] sm:$0xff]
        %v365 = vld [vmem:[#allocation5 + $0x60] sm:$0xff]
        %v366 = vld [vmem:[#allocation5 + $0x68] sm:$0xff]
        %v367 = vld [vmem:[#allocation5 + $0x70] sm:$0xff]
        %v368 = vld [vmem:[#allocation5 + $0x78] sm:$0xff]
        %v369 = vld [vmem:[%s4] sm:$0x1]
        %v371 = vlaneseq
        %v372 = vshrl.u32 %v371, 7
        %v373 = vsub.s32 0, %v372
        %v374 = vrot.slane %v369, %v373
        %376 = vmatprep.subr.mxu0 0.0
        %377 = vmatpush1.msra.mxu0 %v368
        %378 = vmatprep.subr.mxu0 0.0
        %379 = vmatpush1.msra.mxu0 %v367
        %380 = vmatprep.subr.mxu0 0.0
        %381 = vmatpush1.msra.mxu0 %v366
        %382 = vmatprep.subr.mxu0 0.0
        %383 = vmatpush1.msra.mxu0 %v365
        %384 = vmatprep.subr.mxu0 0.0
        %385 = vmatpush1.msra.mxu0 %v364
        %386 = vmatprep.subr.mxu0 0.0
        %387 = vmatpush1.msra.mxu0 %v363
        %388 = vmatprep.subr.mxu0 0.0
        %389 = vmatpush1.msra.mxu0 %v362
        %390 = vmatprep.subr.mxu0 0.0
        %391 = vmatpush1.msra.mxu0 %v361
        %392 = vmatprep.subr.mxu0 0.0
        %393 = vmatpush1.msra.mxu0 %v360
        %394 = vmatprep.subr.mxu0 0.0
        %395 = vmatpush1.msra.mxu0 %v359
        %396 = vmatprep.subr.mxu0 0.0
        %397 = vmatpush1.msra.mxu0 %v358
        %398 = vmatprep.subr.mxu0 0.0
        %399 = vmatpush1.msra.mxu0 %v357
        %400 = vmatprep.subr.mxu0 0.0
        %401 = vmatpush1.msra.mxu0 %v356
        %402 = vmatprep.subr.mxu0 0.0
        %403 = vmatpush1.msra.mxu0 %v355
        %404 = vmatprep.subr.mxu0 0.0
        %405 = vmatpush1.msra.mxu0 %v354
        %406 = vmatprep.subr.mxu0 0.0
        %407 = vmatpush1.msra.mxu0 %v353
        %408 = vmatprep.subr.mxu0 0.0
        %409 = vmatpush2.msra.mxu0 0.0
        %410 = vmatprep.subr.mxu0 0.0
        %411 = vmatpush2.msra.mxu0 0.0
        %412 = vmatprep.subr.mxu0 0.0
        %413 = vmatpush2.msra.mxu0 0.0
        %414 = vmatprep.subr.mxu0 0.0
        %415 = vmatpush2.msra.mxu0 0.0
        %416 = vmatprep.subr.mxu0 0.0
        %417 = vmatpush2.msra.mxu0 0.0
        %418 = vmatprep.subr.mxu0 0.0
        %419 = vmatpush2.msra.mxu0 0.0
        %420 = vmatprep.subr.mxu0 0.0
        %421 = vmatpush2.msra.mxu0 0.0
        %422 = vmatprep.subr.mxu0 0.0
        %423 = vmatpush2.msra.mxu0 0.0
        %424 = vmatprep.subr.mxu0 0.0
        %425 = vmatpush2.msra.mxu0 0.0
        %426 = vmatprep.subr.mxu0 0.0
        %427 = vmatpush2.msra.mxu0 0.0
        %428 = vmatprep.subr.mxu0 0.0
        %429 = vmatpush2.msra.mxu0 0.0
        %430 = vmatprep.subr.mxu0 0.0
        %431 = vmatpush2.msra.mxu0 0.0
        %432 = vmatprep.subr.mxu0 0.0
        %433 = vmatpush2.msra.mxu0 0.0
        %434 = vmatprep.subr.mxu0 0.0
        %435 = vmatpush2.msra.mxu0 0.0
        %436 = vmatprep.subr.mxu0 0.0
        %437 = vmatpush2.msra.mxu0 0.0
        %438 = vmatprep.subr.mxu0 0.0
        %439 = vmatpush2.msra.mxu0 0.0
        %440 = vmatprep.mubr.f32.mxu0 0.0
        %441 = vmatmul.mubr.f32.gmra.mxu0 %v349
        %v442 = vpop.f32.mrf.mxu0
        %v443 = vadd.f32 %v374, %v442
        %v444 = vpop.f32.mrf.mxu0
        %445 = vmatprep.mubr.f32.mxu0 0.0
        %446 = vmatmul.mubr.f32.gmra.mxu0 %v350
        %v447 = vpop.f32.mrf.mxu0
        %v448 = vadd.f32 %v374, %v447
        %v449 = vpop.f32.mrf.mxu0
        %450 = vmatprep.mubr.f32.mxu0 0.0
        %451 = vmatmul.mubr.f32.gmra.mxu0 %v351
        %v452 = vpop.f32.mrf.mxu0
        %v453 = vadd.f32 %v374, %v452
        %v454 = vpop.f32.mrf.mxu0
        %455 = vmatprep.mubr.f32.mxu0 0.0
        %456 = vmatmul.mubr.f32.gmra.mxu0 %v352
        %v457 = vpop.f32.mrf.mxu0
        %v458 = vadd.f32 %v374, %v457
        %v459 = vpop.f32.mrf.mxu0
        %460 = vdwg.mxu0
        %461 = vst [vmem:[%s258] sm:$0xff] %v443
        %462 = vst [vmem:[%s258 + $0x8] sm:$0xff] %v448
        %463 = vst [vmem:[%s258 + $0x10] sm:$0xff] %v453
        %464 = vst [vmem:[%s258 + $0x18] sm:$0xff] %v458
        %s465 = sand.u32 %s141, 1
        %s466 = scalar_lea.sflag [#allocation4], %s465
        %s467 = sand.u32 %s141, 1
        %s468 = smul.addr %s467, 32
        %s469 = scalar_lea.vmem [#allocation7], %s468
        // Predicated region
        $region49: #{tpu_custom_call.1} parent=39 // pred_check
          %p470 = pneg %p151
        $region50: #{tpu_custom_call.1} parent=39 // pred_check_branch
          %472 = sbr.rel (%p470) target = $region52
        $region51: #{tpu_custom_call.1} parent=39 // pred_region
          %s473 = smul.u32 2, %s23
          %s475 = ssub.s32 512, 512
          %476 = vsyncadd %s466, %s475
          %s477 = smul.addr %s473, 2
          %s478 = smul.addr %s477, 128
          %s479 = scalar_lea.hbm %s5, %s478
          %s480 = sshll.u32 %s469, 4
          %s481 = int_to_ptr.vmem [resolvable:$true] %s480
          %486 = dma.vmem_to_hbm [thread:$0]  %s481, 512, %s479, %s466, 128, 128, 8
        $region52: #{tpu_custom_call.1} parent=39 // pred_fallthru
          _
      $region40: #{tpu_custom_call.1} parent=5 // pred_fallthru
        _
      %p487 = scmp.le.s32.totalorder 2, %s18
      // Predicated region
      $region53: #{tpu_custom_call.1} parent=5 // pred_check
        %p488 = pneg %p487
      $region54: #{tpu_custom_call.1} parent=5 // pred_check_branch
        %490 = sbr.rel (%p488) target = $region56
      $region55: #{tpu_custom_call.1} parent=5 // pred_region
        %s491 = ssub.s32 %s18, 2
        // Predicated region
        $region57: #{tpu_custom_call.1} parent=55 // pred_check
          %p492 = pneg %p157
        $region58: #{tpu_custom_call.1} parent=55 // pred_check_branch
          %494 = sbr.rel (%p492) target = $region60
        $region59: #{tpu_custom_call.1} parent=55 // pred_region
          %s495 = sand.u32 %s142, 1
          %s496 = scalar_lea.sflag [#allocation4], %s495
          %s497 = sand.u32 %s142, 1
          %s498 = smul.addr %s497, 32
          %s499 = scalar_lea.vmem [#allocation7], %s498
          %500 = dma.done %s496, 512
        $region60: #{tpu_custom_call.1} parent=55 // pred_fallthru
          _
      $region56: #{tpu_custom_call.1} parent=5 // pred_fallthru
        _
    $region6: #{tpu_custom_call.1} parent=1 // loop_footer
      %s22 = sadd.s32 1, %s18
    $region7: #{tpu_custom_call.1} parent=1 // loop_footer_branch
      %17 = sbr.rel target = $region3
    $region8: #{tpu_custom_call.1} parent=1 // loop_exit
      _
    %501 = vsyncpa [#allocation3], 1
    %s502 = scalar_lea.sflag [#allocation3], 1
    %503 = vsyncpa %s502, 1
    %504 = vsyncpa [#allocation6], 1
    %505 = vsyncpa [#allocation4], 1
    %s506 = scalar_lea.sflag [#allocation4], 1
    %507 = vsyncpa %s506, 1

</llo_original>
